<compile_context>
chip_gen: v6e
topology: v6e:2x2x1
jax: 0.10.0
libtpu: 0.0.40
codegen_flags: <defaults>
</compile_context>

<pallas_src>
import functools

import jax
import jax.numpy as jnp
from jax.experimental import pallas as pl
from jax.experimental.pallas import tpu as pltpu


# "NT" matmul: contract the last dim of both operands (lhs [M,K] x rhs [N,K] -> [M,N]).
_NT_DIMS = (((1,), (1,)), ((), ()))


def _note_classifier_kernel(x_ref, w1_ref, b1_ref, w2_ref, b2_ref, o_ref, *, pack, emb):
    """One batch tile of y = relu(x @ W1^T + b1) @ W2^T + b2 (packed layout).

    x_ref : [TB, pack*D_in]   -- `pack` batch rows per 128-lane row
    w1_ref: [pack*E, pack*D_in] block-diagonal, b1_ref/w2_ref: [pack*E, 1]
    o_ref : [pack, TB]        -- o[g, i] is the prediction for batch row pack*i+g
    """
    # h^T (packed): [pack*E, TB] -- batch lands on the 128-lane axis (lane-dense).
    h = jax.lax.dot_general(
        w1_ref[...], x_ref[...], _NT_DIMS, preferred_element_type=jnp.float32
    )
    h = jnp.maximum(h + b1_ref[...], 0.0)            # b1: [pack*E, 1], lane-broadcast
    # Second linear (out_features == 1): VPU multiply + per-E-group sublane
    # reduction instead of pushing a 1-wide matmul through the MXU.
    hw = h * w2_ref[...]                             # [pack*E, TB] f32
    if pack == 1:
        o = jnp.sum(hw, axis=0, keepdims=True)       # [1, TB]
    else:
        o = jnp.concatenate(
            [jnp.sum(hw[g * emb:(g + 1) * emb, :], axis=0, keepdims=True)
             for g in range(pack)],
            axis=0,
        )                                            # [pack, TB]
    o_ref[...] = (o + b2_ref[0]).astype(o_ref.dtype)  # lane-dense store


def _round_up(n: int, m: int) -> int:
    return ((n + m - 1) // m) * m


def _round_down(n: int, m: int) -> int:
    return (n // m) * m


def note_classifier(x, w1, b1, w2, b2, *, max_batch_tile: int = 32768):
    """Fused NoteClassifier forward.

    x : [B, D_in]            (D_in = x_dim + chain_length)
    w1: [E, D_in]  b1: [E]   (native PyTorch nn.Linear layouts)
    w2: [1, E]     b2: [1]
    returns: [B, 1]
    """
    B, D_in = x.shape
    E = w1.shape[0]

    # ---- lane packing: `pack` batch rows per 128-lane VMEM row ---------------
    pack = min(128 // D_in, 16) if (128 % D_in == 0) else 1
    D_pack = pack * D_in

    B_p = _round_up(B, pack)
    if B_p != B:
        # Tiny pad (< pack rows) only when B is not a multiple of `pack`.
        # Never pad to a multiple of the batch tile (would add a full extra
        # HBM pass over x plus up to TB-1 wasted rows).
        x = jnp.pad(x, ((0, B_p - B), (0, 0)))
    R = B_p // pack                       # packed rows
    x_p = x.reshape(R, D_pack)            # layout-preserving (free) reshape

    # Block-diagonal W1 / tiled b1, w2 (tiny, resident in VMEM across the grid).
    w1_p = jnp.kron(jnp.eye(pack, dtype=w1.dtype), w1)         # [pack*E, pack*D_in]
    b1_p = jnp.tile(b1.reshape(-1), pack).reshape(pack * E, 1)
    w2_p = jnp.tile(w2.reshape(-1), pack).reshape(pack * E, 1)
    b2_s = b2.reshape(1).astype(jnp.float32)                   # scalar via SMEM

    # ---- batch tile (packed rows per grid step), VMEM-aware ------------------
    x_row_bytes = _round_up(D_pack, 128) * 4          # lane-padded f32 x row in VMEM
    tmp_row_bytes = 2 * pack * E * 4                  # f32 h / h*w2 temporaries per row
    per_row = 3 * x_row_bytes + tmp_row_bytes + 8 * pack
    fixed_bytes = 2 * pack * E * (_round_up(D_pack, 128) + 256) * 4  # resident weights
    budget = 24 * 1024 * 1024                          # headroom under 32 MiB scoped VMEM
    avail = max(budget - fixed_bytes, 0)
    cap = max(128, _round_down(avail // per_row, 128))

    if R < 256:
        TB_p = R                                       # single full-extent block
    else:
        TB_p = max(128, _round_down(max(max_batch_tile // pack, 128), 128))
        TB_p = min(TB_p, cap)
        # Guarantee >= 2 grid steps so v7x's two TensorCores both get work.
        TB_p = min(TB_p, _round_up(pl.cdiv(R, 2), 128))
    grid_steps = pl.cdiv(R, TB_p)

    # x stream: triple-buffer when the grid is deep enough to benefit.
    x_index = lambda i: (i, 0)
    x_spec = pl.BlockSpec((TB_p, D_pack), x_index)
    if grid_steps >= 3:
        try:
            x_spec = pl.BlockSpec((TB_p, D_pack), x_index,
                                  pipeline_mode=pl.Buffered(3))
        except (TypeError, AttributeError):
            pass  # older JAX without pipeline_mode: default double-buffering

    flops = 2 * B_p * E * (D_in + 1)
    bytes_accessed = 4 * (B_p * D_in + pack * E * (D_pack + 2) + 1 + pack * R)

    out = pl.pallas_call(
        functools.partial(_note_classifier_kernel, pack=pack, emb=E),
        out_shape=jax.ShapeDtypeStruct((pack, R), x.dtype),
        grid=(grid_steps,),
        in_specs=[
            x_spec,                                              # x: streamed over batch
            pl.BlockSpec((pack * E, D_pack), lambda i: (0, 0)),  # W1 (block-diag): resident
            pl.BlockSpec((pack * E, 1), lambda i: (0, 0)),       # b1: resident
            pl.BlockSpec((pack * E, 1), lambda i: (0, 0)),       # W2 column: resident
            pl.BlockSpec(memory_space=pltpu.MemorySpace.SMEM),   # b2: scalar in SMEM
        ],
        out_specs=pl.BlockSpec((pack, TB_p), lambda i: (0, i)),  # lane-dense output
        compiler_params=pltpu.CompilerParams(
            dimension_semantics=("parallel",),   # batch tiles split across TCs (v7x)
            vmem_limit_bytes=32 * 1024 * 1024,   # <= physical VMEM on v5e/v6e/v7x
        ),
        cost_estimate=pl.CostEstimate(
            flops=flops, transcendentals=0, bytes_accessed=bytes_accessed
        ),
    )(x_p, w1_p, b1_p, w2_p, b2_s)

    # Undo the row interleave: out[g, i] belongs to batch row pack*i + g.
    return out.T.reshape(-1)[:B].reshape(B, 1)


if __name__ == "__main__":
    # Module hyperparameters (small, consistent with the forward pass).
    x_dim = 24
    chain_length = 8
    emb_dim = 32
    d_in = x_dim + chain_length  # input feature dim of note_linear1 (= 32)

    key = jax.random.PRNGKey(0)
    kx, kw1, kb1, kw2, kb2, kx2 = jax.random.split(key, 6)

    # PyTorch nn.Linear parameter layouts: W [out_features, in_features].
    w1 = jax.random.normal(kw1, (emb_dim, d_in), dtype=jnp.float32) * 0.1
    b1 = jax.random.normal(kb1, (emb_dim,), dtype=jnp.float32) * 0.1
    w2 = jax.random.normal(kw2, (1, emb_dim), dtype=jnp.float32) * 0.1
    b2 = jax.random.normal(kb2, (1,), dtype=jnp.float32) * 0.1

    def ref_fwd(xi):
        h = jnp.maximum(xi @ w1.T + b1, 0.0)
        return h @ w2.T + b2

    # Small batch (single block path).
    x = jax.random.normal(kx, (8, d_in), dtype=jnp.float32)
    out = jax.block_until_ready(note_classifier(x, w1, b1, w2, b2))
    assert out.shape == (8, 1), out.shape
    ref = ref_fwd(x)
    assert jnp.allclose(out, ref, atol=1e-4, rtol=1e-4), float(
        jnp.max(jnp.abs(out - ref))
    )

    # Larger, non-multiple-of-pack batch: exercises the multi-step grid,
    # ragged last block, and the >=2-steps (megacore) tile cap.
    x2 = jax.random.normal(kx2, (1030, d_in), dtype=jnp.float32)
    out2 = jax.block_until_ready(
        note_classifier(x2, w1, b1, w2, b2, max_batch_tile=4096)
    )
    assert out2.shape == (1030, 1), out2.shape
    ref2 = ref_fwd(x2)
    assert jnp.allclose(out2, ref2, atol=1e-4, rtol=1e-4), float(
        jnp.max(jnp.abs(out2 - ref2))
    )

    print("KERNEL_OK")
</pallas_src>

<mosaic_0001>
module attributes {stable_mosaic.version = 11 : i64} {
  func.func @_note_classifier_kernel(%arg0: i32, %arg1: memref<2x128xf32, #tpu.memory_space<vmem>>, %arg2: memref<128x128xf32, #tpu.memory_space<vmem>>, %arg3: memref<128x1xf32, #tpu.memory_space<vmem>>, %arg4: memref<128x1xf32, #tpu.memory_space<vmem>>, %arg5: memref<1xf32, #tpu.memory_space<smem>>, %arg6: memref<4x2xf32, #tpu.memory_space<vmem>>) attributes {dimension_semantics = [#tpu.dimension_semantics<parallel>], iteration_bounds = array<i64: 1>, scalar_prefetch = 0 : i64, scratch_operands = 0 : i64, tpu.core_type = #tpu.core_type<tc>, window_params = [{transform_indices = @transform_0, window_bounds = array<i64: 2, 128>}, {pipeline_mode = #tpu.pipeline_mode<synchronous>, transform_indices = @transform_1, window_bounds = array<i64: 128, 128>}, {pipeline_mode = #tpu.pipeline_mode<synchronous>, transform_indices = @transform_2, window_bounds = array<i64: 128, 1>}, {pipeline_mode = #tpu.pipeline_mode<synchronous>, transform_indices = @transform_3, window_bounds = array<i64: 128, 1>}, {transform_indices = @transform_4, window_bounds = array<i64: 1>}, {transform_indices = @transform_5, window_bounds = array<i64: 4, 2>}]} {
    %c0 = arith.constant 0 : index
    %c0_0 = arith.constant 0 : index
    %0 = vector.load %arg2[%c0, %c0_0] : memref<128x128xf32, #tpu.memory_space<vmem>>, vector<128x128xf32>
    %c0_1 = arith.constant 0 : index
    %c0_2 = arith.constant 0 : index
    %1 = vector.load %arg1[%c0_1, %c0_2] : memref<2x128xf32, #tpu.memory_space<vmem>>, vector<2x128xf32>
    %cst = arith.constant dense<0.000000e+00> : vector<128x2xf32>
    %2 = tpu.matmul %0, %1, %cst {dimension_numbers = #tpu.dot_dimension_numbers<[1], [1], [0], [0], [0, 0, 1, 0], [], []>} : vector<128x128xf32>, vector<2x128xf32>, vector<128x2xf32> -> vector<128x2xf32>
    %c0_3 = arith.constant 0 : index
    %c0_4 = arith.constant 0 : index
    %3 = vector.load %arg3[%c0_3, %c0_4] : memref<128x1xf32, #tpu.memory_space<vmem>>, vector<128x1xf32>
    %4 = vector.broadcast %3 : vector<128x1xf32> to vector<128x2xf32>
    %5 = arith.addf %2, %4 : vector<128x2xf32>
    %cst_5 = arith.constant 0.000000e+00 : f32
    %6 = vector.broadcast %cst_5 : f32 to vector<128x2xf32>
    %7 = arith.maximumf %5, %6 : vector<128x2xf32>
    %c0_6 = arith.constant 0 : index
    %c0_7 = arith.constant 0 : index
    %8 = vector.load %arg4[%c0_6, %c0_7] : memref<128x1xf32, #tpu.memory_space<vmem>>, vector<128x1xf32>
    %9 = vector.broadcast %8 : vector<128x1xf32> to vector<128x2xf32>
    %10 = arith.mulf %7, %9 : vector<128x2xf32>
    %11 = vector.extract_strided_slice %10 {offsets = [0, 0], sizes = [32, 2], strides = [1, 1]} : vector<128x2xf32> to vector<32x2xf32>
    %cst_8 = arith.constant dense<0.000000e+00> : vector<2xf32>
    %12 = vector.multi_reduction <add>, %11, %cst_8 [0] : vector<32x2xf32> to vector<2xf32>
    %13 = vector.shape_cast %12 : vector<2xf32> to vector<1x2xf32>
    %14 = vector.extract_strided_slice %10 {offsets = [32, 0], sizes = [32, 2], strides = [1, 1]} : vector<128x2xf32> to vector<32x2xf32>
    %cst_9 = arith.constant dense<0.000000e+00> : vector<2xf32>
    %15 = vector.multi_reduction <add>, %14, %cst_9 [0] : vector<32x2xf32> to vector<2xf32>
    %16 = vector.shape_cast %15 : vector<2xf32> to vector<1x2xf32>
    %17 = vector.extract_strided_slice %10 {offsets = [64, 0], sizes = [32, 2], strides = [1, 1]} : vector<128x2xf32> to vector<32x2xf32>
    %cst_10 = arith.constant dense<0.000000e+00> : vector<2xf32>
    %18 = vector.multi_reduction <add>, %17, %cst_10 [0] : vector<32x2xf32> to vector<2xf32>
    %19 = vector.shape_cast %18 : vector<2xf32> to vector<1x2xf32>
    %20 = vector.extract_strided_slice %10 {offsets = [96, 0], sizes = [32, 2], strides = [1, 1]} : vector<128x2xf32> to vector<32x2xf32>
    %cst_11 = arith.constant dense<0.000000e+00> : vector<2xf32>
    %21 = vector.multi_reduction <add>, %20, %cst_11 [0] : vector<32x2xf32> to vector<2xf32>
    %22 = vector.shape_cast %21 : vector<2xf32> to vector<1x2xf32>
    %23 = tpu.concatenate %13, %16, %19, %22 in 0 : vector<1x2xf32>, vector<1x2xf32>, vector<1x2xf32>, vector<1x2xf32> -> vector<4x2xf32>
    %c0_12 = arith.constant 0 : index
    %24 = memref.load %arg5[%c0_12] : memref<1xf32, #tpu.memory_space<smem>>
    %25 = vector.broadcast %24 : f32 to vector<4x2xf32>
    %26 = arith.addf %23, %25 : vector<4x2xf32>
    %c0_13 = arith.constant 0 : index
    %c0_14 = arith.constant 0 : index
    %27 = vector.load %arg6[%c0_13, %c0_14] : memref<4x2xf32, #tpu.memory_space<vmem>>, vector<4x2xf32>
    tpu.vector_store %arg6[%c0_13, %c0_14], %26 {strides = array<i32>} : memref<4x2xf32, #tpu.memory_space<vmem>>, vector<4x2xf32>,
    return
  }
  func.func @transform_0(%arg0: i32) -> (i32, i32) {
    %c0_i32 = arith.constant 0 : i32
    %c0_i32_0 = arith.constant 0 : i32
    return %arg0, %c0_i32 : i32, i32
  }
  func.func @transform_1(%arg0: i32) -> (i32, i32) {
    %c0_i32 = arith.constant 0 : i32
    %c0_i32_0 = arith.constant 0 : i32
    %c0_i32_1 = arith.constant 0 : i32
    return %c0_i32, %c0_i32_0 : i32, i32
  }
  func.func @transform_2(%arg0: i32) -> (i32, i32) {
    %c0_i32 = arith.constant 0 : i32
    %c0_i32_0 = arith.constant 0 : i32
    %c0_i32_1 = arith.constant 0 : i32
    return %c0_i32, %c0_i32_0 : i32, i32
  }
  func.func @transform_3(%arg0: i32) -> (i32, i32) {
    %c0_i32 = arith.constant 0 : i32
    %c0_i32_0 = arith.constant 0 : i32
    %c0_i32_1 = arith.constant 0 : i32
    return %c0_i32, %c0_i32_0 : i32, i32
  }
  func.func @transform_4(%arg0: i32) -> i32 {
    %c0_i32 = arith.constant 0 : i32
    %c0_i32_0 = arith.constant 0 : i32
    return %c0_i32 : i32
  }
  func.func @transform_5(%arg0: i32) -> (i32, i32) {
    %c0_i32 = arith.constant 0 : i32
    %c0_i32_0 = arith.constant 0 : i32
    return %c0_i32, %arg0 : i32, i32
  }
}

</mosaic_0001>

<llo_original>
// kernel: tpu_custom_call.1
$region0: #{tpu_custom_call.1}
  #allocation0 [shape = 'u32[]', space=smem, size = 0x4, offset = 0x4, fixed_abs, tag = 'smem constant byte address 0x4 - core index']
  #allocation1 [shape = 'u32[144,128]{1,0:T(1,128)}', space=vmem, size = 0x12000, scoped, tag = 'internal scratch']
  #allocation2 [shape = 'f32[1]{0:T(128)S(6)}', space=smem, size = 0x200, scoped, tag = 'scoped memory for tpu_custom_call.1']
  %s0 = inlined_call_operand.vmem [shape: f32[2,128], index: 0, kind: input, shape index: {}]
  %s1 = inlined_call_operand.vmem [shape: f32[128,128], index: 1, kind: input, shape index: {}]
  %s2 = inlined_call_operand.vmem [shape: f32[128,1], index: 2, kind: input, shape index: {}]
  %s3 = inlined_call_operand.vmem [shape: f32[128,1], index: 3, kind: input, shape index: {}]
  %s4 = inlined_call_operand.<no memory space> [shape: f32[1], index: 4, kind: input, shape index: {}]
  %s5 = inlined_call_operand.vmem [shape: f32[4,2], index: 5, kind: output, shape index: {}]
  %s6 = sld [smem:[#allocation0]]
  $region30: #{tpu_custom_call.1} parent=0
    _
  %s8 = ssub.s32 1, %s6
  %s9 = scalar_select 0, %s8, %s6
  %10 = sst [smem:[#allocation2]] %s4
  // Predicated region
  $region2: #{tpu_custom_call.1} parent=0 // pred_check
    _
  $region3: #{tpu_custom_call.1} parent=0 // pred_check_branch
    %12 = sbr.rel (0) target = $region5
  $region4: #{tpu_custom_call.1} parent=0 // pred_region
    _
  $region5: #{tpu_custom_call.1} parent=0 // pred_fallthru
    _
  // Predicated region
  $region6: #{tpu_custom_call.1} parent=0 // pred_check
    _
  $region7: #{tpu_custom_call.1} parent=0 // pred_check_branch
    %14 = sbr.rel (0) target = $region9
  $region8: #{tpu_custom_call.1} parent=0 // pred_region
    _
  $region9: #{tpu_custom_call.1} parent=0 // pred_fallthru
    _
  // Predicated region
  $region10: #{tpu_custom_call.1} parent=0 // pred_check
    _
  $region11: #{tpu_custom_call.1} parent=0 // pred_check_branch
    %16 = sbr.rel (0) target = $region13
  $region12: #{tpu_custom_call.1} parent=0 // pred_region
    _
  $region13: #{tpu_custom_call.1} parent=0 // pred_fallthru
    _
  // Predicated region
  $region14: #{tpu_custom_call.1} parent=0 // pred_check
    _
  $region15: #{tpu_custom_call.1} parent=0 // pred_check_branch
    %18 = sbr.rel (0) target = $region17
  $region16: #{tpu_custom_call.1} parent=0 // pred_region
    _
  $region17: #{tpu_custom_call.1} parent=0 // pred_fallthru
    _
  // Predicated region
  $region18: #{tpu_custom_call.1} parent=0 // pred_check
    _
  $region19: #{tpu_custom_call.1} parent=0 // pred_check_branch
    %20 = sbr.rel (0) target = $region21
  $region20: #{tpu_custom_call.1} parent=0 // pred_region
    _
  $region21: #{tpu_custom_call.1} parent=0 // pred_fallthru
    _
  %v21 = vld [vmem:[%s1] sm:$0xff]
  %v22 = vld [vmem:[%s1 + $0x8] sm:$0xff]
  %v23 = vld [vmem:[%s1 + $0x10] sm:$0xff]
  %v24 = vld [vmem:[%s1 + $0x18] sm:$0xff]
  %v25 = vld [vmem:[%s1 + $0x20] sm:$0xff]
  %v26 = vld [vmem:[%s1 + $0x28] sm:$0xff]
  %v27 = vld [vmem:[%s1 + $0x30] sm:$0xff]
  %v28 = vld [vmem:[%s1 + $0x38] sm:$0xff]
  %v29 = vld [vmem:[%s1 + $0x40] sm:$0xff]
  %v30 = vld [vmem:[%s1 + $0x48] sm:$0xff]
  %v31 = vld [vmem:[%s1 + $0x50] sm:$0xff]
  %v32 = vld [vmem:[%s1 + $0x58] sm:$0xff]
  %v33 = vld [vmem:[%s1 + $0x60] sm:$0xff]
  %v34 = vld [vmem:[%s1 + $0x68] sm:$0xff]
  %v35 = vld [vmem:[%s1 + $0x70] sm:$0xff]
  %v36 = vld [vmem:[%s1 + $0x78] sm:$0xff]
  %v37 = vld [vmem:[%s0] sm:$0x3]
  %v38 = vld [vmem:[%s2] sm:$0xff]
  %v39 = vld [vmem:[%s2 + $0x8] sm:$0xff]
  %v40 = vld [vmem:[%s2 + $0x10] sm:$0xff]
  %v41 = vld [vmem:[%s2 + $0x18] sm:$0xff]
  %v42 = vld [vmem:[%s2 + $0x20] sm:$0xff]
  %v43 = vld [vmem:[%s2 + $0x28] sm:$0xff]
  %v44 = vld [vmem:[%s2 + $0x30] sm:$0xff]
  %v45 = vld [vmem:[%s2 + $0x38] sm:$0xff]
  %v46 = vld [vmem:[%s2 + $0x40] sm:$0xff]
  %v47 = vld [vmem:[%s2 + $0x48] sm:$0xff]
  %v48 = vld [vmem:[%s2 + $0x50] sm:$0xff]
  %v49 = vld [vmem:[%s2 + $0x58] sm:$0xff]
  %v50 = vld [vmem:[%s2 + $0x60] sm:$0xff]
  %v51 = vld [vmem:[%s2 + $0x68] sm:$0xff]
  %v52 = vld [vmem:[%s2 + $0x70] sm:$0xff]
  %v53 = vld [vmem:[%s2 + $0x78] sm:$0xff]
  %55 = vset.pattern.permute.xlu0 0
  %56 = vperm.xlu0 %55, %v38
  %v57 = vpop.permute.xlu0 %56
  %60 = vset.pattern.permute.xlu0 0
  %61 = vperm.xlu0 %60, %v39
  %v62 = vpop.permute.xlu0 %61
  %65 = vset.pattern.permute.xlu0 0
  %66 = vperm.xlu0 %65, %v40
  %v67 = vpop.permute.xlu0 %66
  %70 = vset.pattern.permute.xlu0 0
  %71 = vperm.xlu0 %70, %v41
  %v72 = vpop.permute.xlu0 %71
  %75 = vset.pattern.permute.xlu0 0
  %76 = vperm.xlu0 %75, %v42
  %v77 = vpop.permute.xlu0 %76
  %80 = vset.pattern.permute.xlu0 0
  %81 = vperm.xlu0 %80, %v43
  %v82 = vpop.permute.xlu0 %81
  %85 = vset.pattern.permute.xlu0 0
  %86 = vperm.xlu0 %85, %v44
  %v87 = vpop.permute.xlu0 %86
  %90 = vset.pattern.permute.xlu0 0
  %91 = vperm.xlu0 %90, %v45
  %v92 = vpop.permute.xlu0 %91
  %95 = vset.pattern.permute.xlu0 0
  %96 = vperm.xlu0 %95, %v46
  %v97 = vpop.permute.xlu0 %96
  %100 = vset.pattern.permute.xlu0 0
  %101 = vperm.xlu0 %100, %v47
  %v102 = vpop.permute.xlu0 %101
  %105 = vset.pattern.permute.xlu0 0
  %106 = vperm.xlu0 %105, %v48
  %v107 = vpop.permute.xlu0 %106
  %110 = vset.pattern.permute.xlu0 0
  %111 = vperm.xlu0 %110, %v49
  %v112 = vpop.permute.xlu0 %111
  %115 = vset.pattern.permute.xlu0 0
  %116 = vperm.xlu0 %115, %v50
  %v117 = vpop.permute.xlu0 %116
  %120 = vset.pattern.permute.xlu0 0
  %121 = vperm.xlu0 %120, %v51
  %v122 = vpop.permute.xlu0 %121
  %125 = vset.pattern.permute.xlu0 0
  %126 = vperm.xlu0 %125, %v52
  %v127 = vpop.permute.xlu0 %126
  %130 = vset.pattern.permute.xlu0 0
  %131 = vperm.xlu0 %130, %v53
  %v132 = vpop.permute.xlu0 %131
  %134 = vmatprep.subr.mxu0 0.0
  %135 = vmatpush1.xpose.msra.mxu0 0.0
  %136 = vmatprep.subr.mxu0 0.0
  %137 = vmatpush1.xpose.msra.mxu0 0.0
  %138 = vmatprep.subr.mxu0 0.0
  %139 = vmatpush1.xpose.msra.mxu0 0.0
  %140 = vmatprep.subr.mxu0 0.0
  %141 = vmatpush1.xpose.msra.mxu0 0.0
  %142 = vmatprep.subr.mxu0 0.0
  %143 = vmatpush1.xpose.msra.mxu0 0.0
  %144 = vmatprep.subr.mxu0 0.0
  %145 = vmatpush1.xpose.msra.mxu0 0.0
  %146 = vmatprep.subr.mxu0 0.0
  %147 = vmatpush1.xpose.msra.mxu0 0.0
  %148 = vmatprep.subr.mxu0 0.0
  %149 = vmatpush1.xpose.msra.mxu0 0.0
  %150 = vmatprep.subr.mxu0 0.0
  %151 = vmatpush1.xpose.msra.mxu0 0.0
  %152 = vmatprep.subr.mxu0 0.0
  %153 = vmatpush1.xpose.msra.mxu0 0.0
  %154 = vmatprep.subr.mxu0 0.0
  %155 = vmatpush1.xpose.msra.mxu0 0.0
  %156 = vmatprep.subr.mxu0 0.0
  %157 = vmatpush1.xpose.msra.mxu0 0.0
  %158 = vmatprep.subr.mxu0 0.0
  %159 = vmatpush1.xpose.msra.mxu0 0.0
  %160 = vmatprep.subr.mxu0 0.0
  %161 = vmatpush1.xpose.msra.mxu0 0.0
  %162 = vmatprep.subr.mxu0 0.0
  %163 = vmatpush1.xpose.msra.mxu0 0.0
  %164 = vmatprep.subr.mxu0 0.0
  %165 = vmatpush1.xpose.msra.mxu0 %v37
  %166 = vmatprep.subr.mxu0 0.0
  %167 = vmatpush2.xpose.msra.mxu0 0.0
  %168 = vmatprep.subr.mxu0 0.0
  %169 = vmatpush2.xpose.msra.mxu0 0.0
  %170 = vmatprep.subr.mxu0 0.0
  %171 = vmatpush2.xpose.msra.mxu0 0.0
  %172 = vmatprep.subr.mxu0 0.0
  %173 = vmatpush2.xpose.msra.mxu0 0.0
  %174 = vmatprep.subr.mxu0 0.0
  %175 = vmatpush2.xpose.msra.mxu0 0.0
  %176 = vmatprep.subr.mxu0 0.0
  %177 = vmatpush2.xpose.msra.mxu0 0.0
  %178 = vmatprep.subr.mxu0 0.0
  %179 = vmatpush2.xpose.msra.mxu0 0.0
  %180 = vmatprep.subr.mxu0 0.0
  %181 = vmatpush2.xpose.msra.mxu0 0.0
  %182 = vmatprep.subr.mxu0 0.0
  %183 = vmatpush2.xpose.msra.mxu0 0.0
  %184 = vmatprep.subr.mxu0 0.0
  %185 = vmatpush2.xpose.msra.mxu0 0.0
  %186 = vmatprep.subr.mxu0 0.0
  %187 = vmatpush2.xpose.msra.mxu0 0.0
  %188 = vmatprep.subr.mxu0 0.0
  %189 = vmatpush2.xpose.msra.mxu0 0.0
  %190 = vmatprep.subr.mxu0 0.0
  %191 = vmatpush2.xpose.msra.mxu0 0.0
  %192 = vmatprep.subr.mxu0 0.0
  %193 = vmatpush2.xpose.msra.mxu0 0.0
  %194 = vmatprep.subr.mxu0 0.0
  %195 = vmatpush2.xpose.msra.mxu0 0.0
  %196 = vmatprep.subr.mxu0 0.0
  %197 = vmatpush2.xpose.msra.mxu0 0.0
  %198 = vmatprep.mubr.f32.mxu0 0.0
  %199 = vmatmul.mubr.f32.gmra.mxu0 %v21
  %v200 = vpop.f32.mrf.mxu0
  %v201 = vadd.f32 %v57, %v200
  %v202 = vpop.f32.mrf.mxu0
  %203 = vmatprep.mubr.f32.mxu0 0.0
  %204 = vmatmul.mubr.f32.gmra.mxu0 %v22
  %v205 = vpop.f32.mrf.mxu0
  %v206 = vadd.f32 %v62, %v205
  %v207 = vpop.f32.mrf.mxu0
  %208 = vmatprep.mubr.f32.mxu0 0.0
  %209 = vmatmul.mubr.f32.gmra.mxu0 %v23
  %v210 = vpop.f32.mrf.mxu0
  %v211 = vadd.f32 %v67, %v210
  %v212 = vpop.f32.mrf.mxu0
  %213 = vmatprep.mubr.f32.mxu0 0.0
  %214 = vmatmul.mubr.f32.gmra.mxu0 %v24
  %v215 = vpop.f32.mrf.mxu0
  %v216 = vadd.f32 %v72, %v215
  %v217 = vpop.f32.mrf.mxu0
  %218 = vmatprep.mubr.f32.mxu0 0.0
  %219 = vmatmul.mubr.f32.gmra.mxu0 %v25
  %v220 = vpop.f32.mrf.mxu0
  %v221 = vadd.f32 %v77, %v220
  %v222 = vpop.f32.mrf.mxu0
  %223 = vmatprep.mubr.f32.mxu0 0.0
  %224 = vmatmul.mubr.f32.gmra.mxu0 %v26
  %v225 = vpop.f32.mrf.mxu0
  %v226 = vadd.f32 %v82, %v225
  %v227 = vpop.f32.mrf.mxu0
  %228 = vmatprep.mubr.f32.mxu0 0.0
  %229 = vmatmul.mubr.f32.gmra.mxu0 %v27
  %v230 = vpop.f32.mrf.mxu0
  %v231 = vadd.f32 %v87, %v230
  %v232 = vpop.f32.mrf.mxu0
  %233 = vmatprep.mubr.f32.mxu0 0.0
  %234 = vmatmul.mubr.f32.gmra.mxu0 %v28
  %v235 = vpop.f32.mrf.mxu0
  %v236 = vadd.f32 %v92, %v235
  %v237 = vpop.f32.mrf.mxu0
  %238 = vmatprep.mubr.f32.mxu0 0.0
  %239 = vmatmul.mubr.f32.gmra.mxu0 %v29
  %v240 = vpop.f32.mrf.mxu0
  %v241 = vadd.f32 %v97, %v240
  %v242 = vpop.f32.mrf.mxu0
  %243 = vmatprep.mubr.f32.mxu0 0.0
  %244 = vmatmul.mubr.f32.gmra.mxu0 %v30
  %v245 = vpop.f32.mrf.mxu0
  %v246 = vadd.f32 %v102, %v245
  %v247 = vpop.f32.mrf.mxu0
  %248 = vmatprep.mubr.f32.mxu0 0.0
  %249 = vmatmul.mubr.f32.gmra.mxu0 %v31
  %v250 = vpop.f32.mrf.mxu0
  %v251 = vadd.f32 %v107, %v250
  %v252 = vpop.f32.mrf.mxu0
  %253 = vmatprep.mubr.f32.mxu0 0.0
  %254 = vmatmul.mubr.f32.gmra.mxu0 %v32
  %v255 = vpop.f32.mrf.mxu0
  %v256 = vadd.f32 %v112, %v255
  %v257 = vpop.f32.mrf.mxu0
  %258 = vmatprep.mubr.f32.mxu0 0.0
  %259 = vmatmul.mubr.f32.gmra.mxu0 %v33
  %v260 = vpop.f32.mrf.mxu0
  %v261 = vadd.f32 %v117, %v260
  %v262 = vpop.f32.mrf.mxu0
  %263 = vmatprep.mubr.f32.mxu0 0.0
  %264 = vmatmul.mubr.f32.gmra.mxu0 %v34
  %v265 = vpop.f32.mrf.mxu0
  %v266 = vadd.f32 %v122, %v265
  %v267 = vpop.f32.mrf.mxu0
  %268 = vmatprep.mubr.f32.mxu0 0.0
  %269 = vmatmul.mubr.f32.gmra.mxu0 %v35
  %v270 = vpop.f32.mrf.mxu0
  %v271 = vadd.f32 %v127, %v270
  %v272 = vpop.f32.mrf.mxu0
  %273 = vmatprep.mubr.f32.mxu0 0.0
  %274 = vmatmul.mubr.f32.gmra.mxu0 %v36
  %v275 = vpop.f32.mrf.mxu0
  %v276 = vadd.f32 %v132, %v275
  %v277 = vpop.f32.mrf.mxu0
  %278 = vdwg.mxu0
  %v279 = vmax.f32 %v201, 0.0
  %v280 = vmax.f32 %v206, 0.0
  %v281 = vmax.f32 %v211, 0.0
  %v282 = vmax.f32 %v216, 0.0
  %v283 = vmax.f32 %v221, 0.0
  %v284 = vmax.f32 %v226, 0.0
  %v285 = vmax.f32 %v231, 0.0
  %v286 = vmax.f32 %v236, 0.0
  %v287 = vmax.f32 %v241, 0.0
  %v288 = vmax.f32 %v246, 0.0
  %v289 = vmax.f32 %v251, 0.0
  %v290 = vmax.f32 %v256, 0.0
  %v291 = vmax.f32 %v261, 0.0
  %v292 = vmax.f32 %v266, 0.0
  %v293 = vmax.f32 %v271, 0.0
  %v294 = vmax.f32 %v276, 0.0
  %v295 = vld [vmem:[%s3] sm:$0xff]
  %v296 = vld [vmem:[%s3 + $0x8] sm:$0xff]
  %v297 = vld [vmem:[%s3 + $0x10] sm:$0xff]
  %v298 = vld [vmem:[%s3 + $0x18] sm:$0xff]
  %v299 = vld [vmem:[%s3 + $0x20] sm:$0xff]
  %v300 = vld [vmem:[%s3 + $0x28] sm:$0xff]
  %v301 = vld [vmem:[%s3 + $0x30] sm:$0xff]
  %v302 = vld [vmem:[%s3 + $0x38] sm:$0xff]
  %v303 = vld [vmem:[%s3 + $0x40] sm:$0xff]
  %v304 = vld [vmem:[%s3 + $0x48] sm:$0xff]
  %v305 = vld [vmem:[%s3 + $0x50] sm:$0xff]
  %v306 = vld [vmem:[%s3 + $0x58] sm:$0xff]
  %v307 = vld [vmem:[%s3 + $0x60] sm:$0xff]
  %v308 = vld [vmem:[%s3 + $0x68] sm:$0xff]
  %v309 = vld [vmem:[%s3 + $0x70] sm:$0xff]
  %v310 = vld [vmem:[%s3 + $0x78] sm:$0xff]
  %312 = vset.pattern.permute.xlu0 0
  %313 = vperm.xlu0 %312, %v295
  %v314 = vpop.permute.xlu0 %313
  %317 = vset.pattern.permute.xlu0 0
  %318 = vperm.xlu0 %317, %v296
  %v319 = vpop.permute.xlu0 %318
  %322 = vset.pattern.permute.xlu0 0
  %323 = vperm.xlu0 %322, %v297
  %v324 = vpop.permute.xlu0 %323
  %327 = vset.pattern.permute.xlu0 0
  %328 = vperm.xlu0 %327, %v298
  %v329 = vpop.permute.xlu0 %328
  %332 = vset.pattern.permute.xlu0 0
  %333 = vperm.xlu0 %332, %v299
  %v334 = vpop.permute.xlu0 %333
  %337 = vset.pattern.permute.xlu0 0
  %338 = vperm.xlu0 %337, %v300
  %v339 = vpop.permute.xlu0 %338
  %342 = vset.pattern.permute.xlu0 0
  %343 = vperm.xlu0 %342, %v301
  %v344 = vpop.permute.xlu0 %343
  %347 = vset.pattern.permute.xlu0 0
  %348 = vperm.xlu0 %347, %v302
  %v349 = vpop.permute.xlu0 %348
  %352 = vset.pattern.permute.xlu0 0
  %353 = vperm.xlu0 %352, %v303
  %v354 = vpop.permute.xlu0 %353
  %357 = vset.pattern.permute.xlu0 0
  %358 = vperm.xlu0 %357, %v304
  %v359 = vpop.permute.xlu0 %358
  %362 = vset.pattern.permute.xlu0 0
  %363 = vperm.xlu0 %362, %v305
  %v364 = vpop.permute.xlu0 %363
  %367 = vset.pattern.permute.xlu0 0
  %368 = vperm.xlu0 %367, %v306
  %v369 = vpop.permute.xlu0 %368
  %372 = vset.pattern.permute.xlu0 0
  %373 = vperm.xlu0 %372, %v307
  %v374 = vpop.permute.xlu0 %373
  %377 = vset.pattern.permute.xlu0 0
  %378 = vperm.xlu0 %377, %v308
  %v379 = vpop.permute.xlu0 %378
  %382 = vset.pattern.permute.xlu0 0
  %383 = vperm.xlu0 %382, %v309
  %v384 = vpop.permute.xlu0 %383
  %387 = vset.pattern.permute.xlu0 0
  %388 = vperm.xlu0 %387, %v310
  %v389 = vpop.permute.xlu0 %388
  %v391 = vmul.f32 %v279, %v314
  %v392 = vmul.f32 %v280, %v319
  %v393 = vmul.f32 %v281, %v324
  %v394 = vmul.f32 %v282, %v329
  %v395 = vmul.f32 %v283, %v334
  %v396 = vmul.f32 %v284, %v339
  %v397 = vmul.f32 %v285, %v344
  %v398 = vmul.f32 %v286, %v349
  %v399 = vmul.f32 %v287, %v354
  %v400 = vmul.f32 %v288, %v359
  %v401 = vmul.f32 %v289, %v364
  %v402 = vmul.f32 %v290, %v369
  %v403 = vmul.f32 %v291, %v374
  %v404 = vmul.f32 %v292, %v379
  %v405 = vmul.f32 %v293, %v384
  %v406 = vmul.f32 %v294, %v389
  %vm407 = vcmask 15360
  %v408 = vsel %vm407, %v391, 0.0
  %v409 = vsel %vm407, %v392, 0.0
  %v410 = vadd.f32 %v408, %v409
  %v411 = vsel %vm407, %v393, 0.0
  %v412 = vadd.f32 %v410, %v411
  %v413 = vsel %vm407, %v394, 0.0
  %v414 = vadd.f32 %v412, %v413
  %v415 = vrot.slane %v414, 4
  %v416 = vadd.f32 %v414, %v415
  %v417 = vrot.slane %v416, 2
  %v418 = vadd.f32 %v416, %v417
  %v419 = vrot.slane %v418, 1
  %v420 = vadd.f32 %v418, %v419
  %v421 = vsel %vm407, %v395, 0.0
  %v422 = vsel %vm407, %v396, 0.0
  %v423 = vadd.f32 %v421, %v422
  %v424 = vsel %vm407, %v397, 0.0
  %v425 = vadd.f32 %v423, %v424
  %v426 = vsel %vm407, %v398, 0.0
  %v427 = vadd.f32 %v425, %v426
  %v428 = vrot.slane %v427, 4
  %v429 = vadd.f32 %v427, %v428
  %v430 = vrot.slane %v429, 2
  %v431 = vadd.f32 %v429, %v430
  %v432 = vrot.slane %v431, 1
  %v433 = vadd.f32 %v431, %v432
  %v434 = vsel %vm407, %v399, 0.0
  %v435 = vsel %vm407, %v400, 0.0
  %v436 = vadd.f32 %v434, %v435
  %v437 = vsel %vm407, %v401, 0.0
  %v438 = vadd.f32 %v436, %v437
  %v439 = vsel %vm407, %v402, 0.0
  %v440 = vadd.f32 %v438, %v439
  %v441 = vrot.slane %v440, 4
  %v442 = vadd.f32 %v440, %v441
  %v443 = vrot.slane %v442, 2
  %v444 = vadd.f32 %v442, %v443
  %v445 = vrot.slane %v444, 1
  %v446 = vadd.f32 %v444, %v445
  %v447 = vsel %vm407, %v403, 0.0
  %v448 = vsel %vm407, %v404, 0.0
  %v449 = vadd.f32 %v447, %v448
  %v450 = vsel %vm407, %v405, 0.0
  %v451 = vadd.f32 %v449, %v450
  %v452 = vsel %vm407, %v406, 0.0
  %v453 = vadd.f32 %v451, %v452
  %v454 = vrot.slane %v453, 4
  %v455 = vadd.f32 %v453, %v454
  %v456 = vrot.slane %v455, 2
  %v457 = vadd.f32 %v455, %v456
  %v458 = vrot.slane %v457, 1
  %v459 = vadd.f32 %v457, %v458
  %vm460 = vcmask 1040384
  %v461 = vsel %vm460, %v420, %v433
  %vm462 = vcmask 1041408
  %v463 = vsel %vm462, %v461, %v446
  %vm464 = vcmask 1042432
  %v465 = vsel %vm464, %v463, %v459
  %s466 = sld [smem:[#allocation2]]
  %v467 = vstv %s466
  %v468 = vadd.f32 %v465, %v467
  %vm469 = vcmask 11264
  %470 = vst.msk [vmem:[%s5] sm:$0xf] %vm469, %v468
  // Predicated region
  $region22: #{tpu_custom_call.1} parent=0 // pred_check
    _
  $region23: #{tpu_custom_call.1} parent=0 // pred_check_branch
    %472 = sbr.rel (0) target = $region25
  $region24: #{tpu_custom_call.1} parent=0 // pred_region
    _
  $region25: #{tpu_custom_call.1} parent=0 // pred_fallthru
    _
  // Predicated region
  $region26: #{tpu_custom_call.1} parent=0 // pred_check
    _
  $region27: #{tpu_custom_call.1} parent=0 // pred_check_branch
    %474 = sbr.rel (0) target = $region29
  $region28: #{tpu_custom_call.1} parent=0 // pred_region
    _
  $region29: #{tpu_custom_call.1} parent=0 // pred_fallthru
    _

</llo_original>
